<compile_context>
chip_gen: v7x
topology: tpu7x:2x2x1
jax: 0.10.0
libtpu: 0.0.40
codegen_flags: <defaults>
</compile_context>

<pallas_src>
import numpy as np
import jax
import jax.numpy as jnp
from jax.experimental import pallas as pl
from jax.experimental.pallas import tpu as pltpu

NUM_JOINTS = 24
NUM_SHAPES = 10
NUM_POSE_BASIS = (NUM_JOINTS - 1) * 9          # 207
NUM_COEFFS = NUM_SHAPES + NUM_POSE_BASIS       # 217
K_PAD = 256                                    # padded contraction dim (217 -> 256)
J_PAD = 32                                     # padded joint dim (24 -> 32)
V = 512                                        # synthetic small mesh (real SMPL: 6890 -> pad 6912)
V_TILE = 128                                   # vertex tile (lane axis); 3*V_TILE = 384 lanes/block

# standard SMPL kinematic tree (parents[0] = -1)
PARENTS = np.array([-1, 0, 0, 0, 1, 2, 3, 4, 5, 6, 7, 8, 9, 9, 9,
                    12, 13, 14, 16, 17, 18, 19, 20, 21], dtype=np.int64)


# ----------------------------------------------------------------------------
# plain-JAX glue (small, sequential, or per-joint ops)
# ----------------------------------------------------------------------------
def batch_rodrigues(rot_vecs):
    """(N, 3) axis-angle -> (N, 3, 3) rotation matrices (matches smplx)."""
    n = rot_vecs.shape[0]
    angle = jnp.linalg.norm(rot_vecs + 1e-8, axis=1, keepdims=True)      # (N,1)
    rot_dir = rot_vecs / angle
    cos = jnp.cos(angle)[:, None]                                        # (N,1,1)
    sin = jnp.sin(angle)[:, None]
    rx, ry, rz = jnp.split(rot_dir, 3, axis=1)
    zeros = jnp.zeros_like(rx)
    K = jnp.concatenate([zeros, -rz, ry, rz, zeros, -rx, -ry, rx, zeros],
                        axis=1).reshape(n, 3, 3)
    ident = jnp.eye(3, dtype=rot_vecs.dtype)[None]
    return ident + sin * K + (1.0 - cos) * jnp.matmul(K, K)


def _tree_levels(parents):
    """Group joints by tree depth (static, numpy) for level-batched recursion."""
    depth = np.zeros(len(parents), dtype=np.int64)
    for i in range(1, len(parents)):
        depth[i] = depth[parents[i]] + 1
    levels = []
    for d in range(1, int(depth.max()) + 1):
        idx = np.nonzero(depth == d)[0]
        levels.append((idx, parents[idx]))
    return levels


def batch_rigid_transform(rot_mats, joints, parents):
    """rot_mats (B,J,3,3), joints (B,J,3) -> (posed_joints, rel_transforms (B,J,4,4))."""
    b, j = joints.shape[:2]
    dtype = rot_mats.dtype
    joints_e = joints[..., None]                                          # (B,J,3,1)
    rel_joints = joints_e.at[:, 1:].add(-joints_e[:, parents[1:]])
    top = jnp.concatenate([rot_mats, rel_joints], axis=-1)                # (B,J,3,4)
    bottom = jnp.broadcast_to(jnp.array([0, 0, 0, 1], dtype=dtype), (b, j, 1, 4))
    transforms_mat = jnp.concatenate([top, bottom], axis=-2)              # (B,J,4,4)
    # Level-batched kinematic chain: one batched 4x4 matmul per tree depth
    # (8 levels) instead of 23 sequential tiny matmul HLOs.
    world = transforms_mat                                                # joint 0 already world
    for idx, par in _tree_levels(parents):
        child_world = jnp.matmul(world[:, par], transforms_mat[:, idx])
        world = world.at[:, idx].set(child_world)
    transforms = world                                                    # (B,J,4,4)
    posed_joints = transforms[:, :, :3, 3]
    joints_hom = jnp.concatenate(
        [joints_e, jnp.zeros((b, j, 1, 1), dtype=dtype)], axis=2)         # (B,J,4,1)
    rel = jnp.matmul(transforms, joints_hom)                              # (B,J,4,1)
    rel_transforms = transforms - jnp.pad(rel, ((0, 0), (0, 0), (0, 0), (3, 0)))
    return posed_joints, rel_transforms


# ----------------------------------------------------------------------------
# fused Pallas kernel: blendshapes + LBS skinning (+ global R,Th folded in)
# ----------------------------------------------------------------------------
def smpl_lbs_kernel(coeffs_ref, basis_ref, vt_ref, aT_ref, wT_ref, out_ref):
    # coeffs_ref : (B, 256) bf16     [betas | pose_feature | 0-pad]
    # basis_ref  : (256, 3*Vt) bf16  tile-major blendshape basis (col = c*Vt + v)
    # vt_ref     : (1, 3*Vt) f32     template, same per-tile layout
    # aT_ref     : (16*B, 32) f32    world-folded affines; row = 16*b + 4*col + row
    # wT_ref     : (32, Vt) bf16     skinning weights^T (joints padded to 32)
    # out_ref    : (B, 3, Vt) f32    coordinate-major world vertices (this V-tile)
    bsz = out_ref.shape[0]
    nvt = out_ref.shape[2]

    # --- pose + shape blendshapes: one batched MXU matmul, M = B, N = 3*Vt ---
    v_posed = vt_ref[...] + jnp.dot(coeffs_ref[...], basis_ref[...],
                                    preferred_element_type=jnp.float32)      # (B, 3*Vt) f32

    # --- per-vertex blended transforms: one batched matmul, M = 16*B ---
    # Tt[16*b + 4*c + r, v] = T'[b, v, r, c]  (c == 3 -> translation column)
    Tt = jnp.dot(aT_ref[...], wT_ref[...].astype(jnp.float32),
                 preferred_element_type=jnp.float32)                         # (16B, Vt) f32

    # --- apply affine transform on (3, Vt) tiles; B is small & static ---
    # TODO(synk): if B grows past ~4, switch to lax.fori_loop / put B on a grid
    # axis (vreg pressure), and replace the (1,Vt)->(3,Vt) broadcast with a
    # stride-0 sublane read from a VMEM scratch.
    for b in range(bsz):
        base = 16 * b
        acc = Tt[base + 12:base + 15, :]                                     # translation (3, Vt)
        for c in range(3):
            acc = acc + (Tt[base + 4 * c:base + 4 * c + 3, :]
                         * v_posed[b:b + 1, c * nvt:(c + 1) * nvt])          # (3,Vt)*(1,Vt)
        out_ref[b] = acc


def smpl_lbs_pallas(coeffs, basis, vt_flat, aT, weights_T, *, v_tile=V_TILE):
    bsz = coeffs.shape[0]
    kdim = coeffs.shape[1]                       # 256
    jdim = weights_T.shape[0]                    # 32
    nv = weights_T.shape[1]                      # padded vertex count
    assert nv % v_tile == 0 and (3 * v_tile) % 128 == 0
    nt = nv // v_tile
    three_vt = 3 * v_tile

    cost = pl.CostEstimate(
        flops=int(2 * bsz * kdim * 3 * nv            # blendshape matmul
                  + 2 * 16 * bsz * jdim * nv         # blended-transform matmul
                  + 8 * bsz * 3 * nv),               # affine apply
        transcendentals=0,
        bytes_accessed=int(coeffs.size * coeffs.dtype.itemsize
                           + basis.size * basis.dtype.itemsize
                           + vt_flat.size * vt_flat.dtype.itemsize
                           + aT.size * aT.dtype.itemsize
                           + weights_T.size * weights_T.dtype.itemsize
                           + bsz * 3 * nv * 4))

    grid_spec = pltpu.PrefetchScalarGridSpec(
        num_scalar_prefetch=0, grid=(nt,),
        in_specs=[
            pl.BlockSpec((bsz, kdim), lambda i: (0, 0)),          # coeffs (whole, resident)
            pl.BlockSpec((kdim, three_vt), lambda i: (0, i)),     # basis, tile-major columns
            pl.BlockSpec((1, three_vt), lambda i: (0, i)),        # template, same layout
            pl.BlockSpec((16 * bsz, jdim), lambda i: (0, 0)),     # affines (whole, resident)
            pl.BlockSpec((jdim, v_tile), lambda i: (0, i)),       # weights^T
        ],
        out_specs=pl.BlockSpec((bsz, 3, v_tile), lambda i: (0, 0, i)))

    return pl.pallas_call(
        smpl_lbs_kernel,
        out_shape=jax.ShapeDtypeStruct((bsz, 3, nv), jnp.float32),
        grid_spec=grid_spec,
        cost_estimate=cost,
        compiler_params=pltpu.CompilerParams(
            # V-tiles are fully independent: parallel lets v7x split them
            # across its two TensorCores; no-op on single-TC v5e/v6e.
            dimension_semantics=("parallel",)),
    )(coeffs, basis, vt_flat, aT, weights_T)


# ----------------------------------------------------------------------------
# full forward (== SMPLlayer.forward for model_type='smpl', return_verts=True)
# ----------------------------------------------------------------------------
def smpl_forward(poses, shapes, Rh, Th, P):
    bsz = poses.shape[0]
    dtype = poses.dtype

    rot = batch_rodrigues(Rh)                                             # (B,3,3)
    rot_mats = batch_rodrigues(poses.reshape(-1, 3)).reshape(bsz, NUM_JOINTS, 3, 3)
    pose_feature = (rot_mats[:, 1:] - jnp.eye(3, dtype=dtype)).reshape(bsz, NUM_POSE_BASIS)
    coeffs = jnp.concatenate([shapes, pose_feature], axis=1)              # (B, 217)
    coeffs = jnp.pad(coeffs, ((0, 0), (0, K_PAD - NUM_COEFFS))).astype(jnp.bfloat16)

    # joints via precomposed (J_regressor @ [v_template, shapedirs]) basis — tiny
    joints = P['J_template'][None] + jnp.einsum('bk,jck->bjc',
                                                shapes, P['J_shapedirs'])  # (B,24,3)
    _, A = batch_rigid_transform(rot_mats, joints, PARENTS)               # (B,24,4,4)

    # fold global rotation + translation into the per-joint transforms
    top = jnp.concatenate([rot, Th[:, :, None]], axis=-1)                 # (B,3,4)
    bottom = jnp.broadcast_to(jnp.array([0, 0, 0, 1], dtype=dtype), (bsz, 1, 4))
    G = jnp.concatenate([top, bottom], axis=-2)                           # (B,4,4)
    Aw = jnp.matmul(G[:, None, :, :], A)                                  # (B,24,4,4)

    # (B,24,3,4) -> pad joints 24->32, rows 3->4 -> (B,4cols,4rows,32joints)
    # -> (16B, 32).  Row layout: 16*b + 4*col + row (col 3 = translation).
    A34 = jnp.pad(Aw[:, :, :3, :],
                  ((0, 0), (0, J_PAD - NUM_JOINTS), (0, 1), (0, 0)))      # (B,32,4,4)
    aT = jnp.transpose(A34, (0, 3, 2, 1)).reshape(bsz * 16, J_PAD)        # f32

    verts_cm = smpl_lbs_pallas(coeffs, P['basis'], P['vt_flat'], aT, P['weights_T'])
    return jnp.transpose(verts_cm, (0, 2, 1))                             # (B, V, 3)


smpl_forward_jit = jax.jit(smpl_forward)


# ----------------------------------------------------------------------------
# pure-JAX f32 reference (mirrors torch lbs) for correctness check
# ----------------------------------------------------------------------------
def reference_forward(poses, shapes, Rh, Th, P):
    bsz = poses.shape[0]
    rot = batch_rodrigues(Rh)
    v_shaped = P['v_template'][None] + jnp.einsum('bl,vcl->bvc', shapes, P['shapedirs'])
    joints = jnp.einsum('jv,bvc->bjc', P['J_regressor'], v_shaped)
    rot_mats = batch_rodrigues(poses.reshape(-1, 3)).reshape(bsz, NUM_JOINTS, 3, 3)
    pose_feature = (rot_mats[:, 1:] - jnp.eye(3, dtype=poses.dtype)).reshape(bsz, -1)
    pose_offsets = (pose_feature @ P['posedirs']).reshape(bsz, V, 3)
    v_posed = v_shaped + pose_offsets
    _, A = batch_rigid_transform(rot_mats, joints, PARENTS)
    T = jnp.einsum('vj,bjmn->bvmn', P['weights'], A)
    v_homo = jnp.concatenate([v_posed, jnp.ones((bsz, V, 1), dtype=poses.dtype)], axis=-1)
    verts = jnp.einsum('bvmn,bvn->bvm', T, v_homo)[..., :3]
    return jnp.matmul(verts, jnp.transpose(rot, (0, 2, 1))) + Th[:, None, :]


# ----------------------------------------------------------------------------
# deterministic synthetic parameter init (shapes match SMPL_*.pkl buffers)
# ----------------------------------------------------------------------------
def make_params(key, v_tile=V_TILE):
    ks = jax.random.split(key, 5)
    v_template = 0.5 * jax.random.normal(ks[0], (V, 3), dtype=jnp.float32)
    shapedirs = 0.03 * jax.random.normal(ks[1], (V, 3, NUM_SHAPES), dtype=jnp.float32)
    posedirs_vck = 0.01 * jax.random.normal(ks[2], (V, 3, NUM_POSE_BASIS),
                                            dtype=jnp.float32)
    jr = jax.random.uniform(ks[3], (NUM_JOINTS, V), dtype=jnp.float32) + 1e-3
    J_regressor = jr / jnp.sum(jr, axis=1, keepdims=True)
    w = jax.random.uniform(ks[4], (V, NUM_JOINTS), dtype=jnp.float32) + 1e-3
    weights = w / jnp.sum(w, axis=1, keepdims=True)

    # module layout: posedirs = reshape(V*3, 207).T -> (207, V*3), vertex-major flatten
    posedirs = jnp.transpose(posedirs_vck.reshape(V * 3, NUM_POSE_BASIS), (1, 0))

    # ---- kernel layouts (one-time model-load work) ----------------------------
    assert V % v_tile == 0
    nt = V // v_tile
    # (V,3,K) -> (K,3,V), pad K 217->256, then tile-major flatten so each V-tile's
    # 3*Vt columns are contiguous with within-tile column = c*Vt + v_in_tile.
    basis_kcv = jnp.concatenate([jnp.transpose(shapedirs, (2, 1, 0)),
                                 jnp.transpose(posedirs_vck, (2, 1, 0))], axis=0)
    basis_kcv = jnp.pad(basis_kcv, ((0, K_PAD - NUM_COEFFS), (0, 0), (0, 0)))   # (256,3,V)
    basis = (basis_kcv.reshape(K_PAD, 3, nt, v_tile)
             .transpose(0, 2, 1, 3)
             .reshape(K_PAD, nt * 3 * v_tile)
             .astype(jnp.bfloat16))                                             # bf16 stream
    vt_flat = (jnp.transpose(v_template, (1, 0))
               .reshape(3, nt, v_tile)
               .transpose(1, 0, 2)
               .reshape(1, nt * 3 * v_tile))                                    # f32 (tiny)
    weights_T = jnp.pad(jnp.transpose(weights, (1, 0)),
                        ((0, J_PAD - NUM_JOINTS), (0, 0))).astype(jnp.bfloat16) # (32, V) bf16
    # joint regression composed with shape basis (done once at model load)
    J_template = J_regressor @ v_template                                       # (24, 3)
    J_shapedirs = jnp.einsum('jv,vck->jck', J_regressor, shapedirs)             # (24, 3, 10)

    return dict(
        # reference layouts
        v_template=v_template, shapedirs=shapedirs, posedirs=posedirs,
        J_regressor=J_regressor, weights=weights,
        # kernel layouts
        basis=basis, vt_flat=vt_flat, weights_T=weights_T,
        J_template=J_template, J_shapedirs=J_shapedirs,
    )


if __name__ == "__main__":
    key = jax.random.PRNGKey(0)
    kp, kparam = jax.random.split(key)
    P = make_params(kparam)

    B = 2
    k1, k2, k3, k4 = jax.random.split(kp, 4)
    poses = 0.3 * jax.random.normal(k1, (B, NUM_JOINTS * 3), dtype=jnp.float32)   # (2, 72)
    shapes = jax.random.normal(k2, (B, NUM_SHAPES), dtype=jnp.float32)            # (2, 10)
    Rh = 0.5 * jax.random.normal(k3, (B, 3), dtype=jnp.float32)
    Th = jax.random.normal(k4, (B, 3), dtype=jnp.float32)

    verts = jax.block_until_ready(smpl_forward_jit(poses, shapes, Rh, Th, P))
    ref = jax.block_until_ready(reference_forward(poses, shapes, Rh, Th, P))

    assert verts.shape == (B, V, 3), verts.shape
    # Streamed weights (basis / skinning weights / coeffs) are bf16 in the kernel
    # path while the reference is full f32, so tolerance sits at the bf16 level.
    if not bool(jnp.allclose(verts, ref, atol=5e-3, rtol=5e-3)):
        err = float(jnp.max(jnp.abs(verts - ref)))
        raise AssertionError(f"Pallas SMPL forward does not match reference (max |err|={err})")
    print("KERNEL_OK")
</pallas_src>

<mosaic_0001>
module attributes {stable_mosaic.version = 11 : i64} {
  func.func @smpl_lbs_kernel(%arg0: i32, %arg1: memref<2x256xbf16, #tpu.memory_space<vmem>>, %arg2: memref<256x384xbf16, #tpu.memory_space<vmem>>, %arg3: memref<1x384xf32, #tpu.memory_space<vmem>>, %arg4: memref<32x32xf32, #tpu.memory_space<vmem>>, %arg5: memref<32x128xbf16, #tpu.memory_space<vmem>>, %arg6: memref<2x3x128xf32, #tpu.memory_space<vmem>>) attributes {dimension_semantics = [#tpu.dimension_semantics<parallel>], iteration_bounds = array<i64: 4>, scalar_prefetch = 0 : i64, scratch_operands = 0 : i64, tpu.core_type = #tpu.core_type<tc>, window_params = [{pipeline_mode = #tpu.pipeline_mode<synchronous>, transform_indices = @transform_0, window_bounds = array<i64: 2, 256>}, {transform_indices = @transform_1, window_bounds = array<i64: 256, 384>}, {transform_indices = @transform_2, window_bounds = array<i64: 1, 384>}, {pipeline_mode = #tpu.pipeline_mode<synchronous>, transform_indices = @transform_3, window_bounds = array<i64: 32, 32>}, {transform_indices = @transform_4, window_bounds = array<i64: 32, 128>}, {transform_indices = @transform_5, window_bounds = array<i64: 2, 3, 128>}]} {
    %c0 = arith.constant 0 : index
    %c0_0 = arith.constant 0 : index
    %0 = vector.load %arg3[%c0, %c0_0] : memref<1x384xf32, #tpu.memory_space<vmem>>, vector<1x384xf32>
    %c0_1 = arith.constant 0 : index
    %c0_2 = arith.constant 0 : index
    %1 = vector.load %arg1[%c0_1, %c0_2] : memref<2x256xbf16, #tpu.memory_space<vmem>>, vector<2x256xbf16>
    %c0_3 = arith.constant 0 : index
    %c0_4 = arith.constant 0 : index
    %2 = vector.load %arg2[%c0_3, %c0_4] : memref<256x384xbf16, #tpu.memory_space<vmem>>, vector<256x384xbf16>
    %cst = arith.constant dense<0.000000e+00> : vector<2x384xf32>
    %3 = tpu.matmul %1, %2, %cst {dimension_numbers = #tpu.dot_dimension_numbers<[1], [0], [0], [1], [0, 0, 1, 1], [], []>} : vector<2x256xbf16>, vector<256x384xbf16>, vector<2x384xf32> -> vector<2x384xf32>
    %4 = vector.broadcast %0 : vector<1x384xf32> to vector<2x384xf32>
    %5 = arith.addf %4, %3 : vector<2x384xf32>
    %c0_5 = arith.constant 0 : index
    %c0_6 = arith.constant 0 : index
    %6 = vector.load %arg4[%c0_5, %c0_6] : memref<32x32xf32, #tpu.memory_space<vmem>>, vector<32x32xf32>
    %c0_7 = arith.constant 0 : index
    %c0_8 = arith.constant 0 : index
    %7 = vector.load %arg5[%c0_7, %c0_8] : memref<32x128xbf16, #tpu.memory_space<vmem>>, vector<32x128xbf16>
    %8 = arith.extf %7 : vector<32x128xbf16> to vector<32x128xf32>
    %cst_9 = arith.constant dense<0.000000e+00> : vector<32x128xf32>
    %9 = tpu.matmul %6, %8, %cst_9 {dimension_numbers = #tpu.dot_dimension_numbers<[1], [0], [0], [1], [0, 0, 1, 1], [], []>} : vector<32x32xf32>, vector<32x128xf32>, vector<32x128xf32> -> vector<32x128xf32>
    %10 = vector.extract_strided_slice %9 {offsets = [12, 0], sizes = [3, 128], strides = [1, 1]} : vector<32x128xf32> to vector<3x128xf32>
    %11 = vector.extract_strided_slice %9 {offsets = [0, 0], sizes = [3, 128], strides = [1, 1]} : vector<32x128xf32> to vector<3x128xf32>
    %12 = vector.extract_strided_slice %5 {offsets = [0, 0], sizes = [1, 128], strides = [1, 1]} : vector<2x384xf32> to vector<1x128xf32>
    %13 = vector.broadcast %12 : vector<1x128xf32> to vector<3x128xf32>
    %14 = arith.mulf %11, %13 : vector<3x128xf32>
    %15 = arith.addf %10, %14 : vector<3x128xf32>
    %16 = vector.extract_strided_slice %9 {offsets = [4, 0], sizes = [3, 128], strides = [1, 1]} : vector<32x128xf32> to vector<3x128xf32>
    %17 = vector.extract_strided_slice %5 {offsets = [0, 128], sizes = [1, 128], strides = [1, 1]} : vector<2x384xf32> to vector<1x128xf32>
    %18 = vector.broadcast %17 : vector<1x128xf32> to vector<3x128xf32>
    %19 = arith.mulf %16, %18 : vector<3x128xf32>
    %20 = arith.addf %15, %19 : vector<3x128xf32>
    %21 = vector.extract_strided_slice %9 {offsets = [8, 0], sizes = [3, 128], strides = [1, 1]} : vector<32x128xf32> to vector<3x128xf32>
    %22 = vector.extract_strided_slice %5 {offsets = [0, 256], sizes = [1, 128], strides = [1, 1]} : vector<2x384xf32> to vector<1x128xf32>
    %23 = vector.broadcast %22 : vector<1x128xf32> to vector<3x128xf32>
    %24 = arith.mulf %21, %23 : vector<3x128xf32>
    %25 = arith.addf %20, %24 : vector<3x128xf32>
    %c0_10 = arith.constant 0 : index
    %c0_11 = arith.constant 0 : index
    %c0_12 = arith.constant 0 : index
    %26 = vector.load %arg6[%c0_10, %c0_11, %c0_12] : memref<2x3x128xf32, #tpu.memory_space<vmem>>, vector<1x3x128xf32>
    %27 = vector.shape_cast %26 : vector<1x3x128xf32> to vector<3x128xf32>
    %28 = vector.shape_cast %25 : vector<3x128xf32> to vector<1x3x128xf32>
    tpu.vector_store %arg6[%c0_10, %c0_11, %c0_12], %28 {strides = array<i32>} : memref<2x3x128xf32, #tpu.memory_space<vmem>>, vector<1x3x128xf32>,
    %29 = vector.extract_strided_slice %9 {offsets = [28, 0], sizes = [3, 128], strides = [1, 1]} : vector<32x128xf32> to vector<3x128xf32>
    %30 = vector.extract_strided_slice %9 {offsets = [16, 0], sizes = [3, 128], strides = [1, 1]} : vector<32x128xf32> to vector<3x128xf32>
    %31 = vector.extract_strided_slice %5 {offsets = [1, 0], sizes = [1, 128], strides = [1, 1]} : vector<2x384xf32> to vector<1x128xf32>
    %32 = vector.broadcast %31 : vector<1x128xf32> to vector<3x128xf32>
    %33 = arith.mulf %30, %32 : vector<3x128xf32>
    %34 = arith.addf %29, %33 : vector<3x128xf32>
    %35 = vector.extract_strided_slice %9 {offsets = [20, 0], sizes = [3, 128], strides = [1, 1]} : vector<32x128xf32> to vector<3x128xf32>
    %36 = vector.extract_strided_slice %5 {offsets = [1, 128], sizes = [1, 128], strides = [1, 1]} : vector<2x384xf32> to vector<1x128xf32>
    %37 = vector.broadcast %36 : vector<1x128xf32> to vector<3x128xf32>
    %38 = arith.mulf %35, %37 : vector<3x128xf32>
    %39 = arith.addf %34, %38 : vector<3x128xf32>
    %40 = vector.extract_strided_slice %9 {offsets = [24, 0], sizes = [3, 128], strides = [1, 1]} : vector<32x128xf32> to vector<3x128xf32>
    %41 = vector.extract_strided_slice %5 {offsets = [1, 256], sizes = [1, 128], strides = [1, 1]} : vector<2x384xf32> to vector<1x128xf32>
    %42 = vector.broadcast %41 : vector<1x128xf32> to vector<3x128xf32>
    %43 = arith.mulf %40, %42 : vector<3x128xf32>
    %44 = arith.addf %39, %43 : vector<3x128xf32>
    %c1 = arith.constant 1 : index
    %c0_13 = arith.constant 0 : index
    %c0_14 = arith.constant 0 : index
    %45 = vector.load %arg6[%c1, %c0_13, %c0_14] : memref<2x3x128xf32, #tpu.memory_space<vmem>>, vector<1x3x128xf32>
    %46 = vector.shape_cast %45 : vector<1x3x128xf32> to vector<3x128xf32>
    %47 = vector.shape_cast %44 : vector<3x128xf32> to vector<1x3x128xf32>
    tpu.vector_store %arg6[%c1, %c0_13, %c0_14], %47 {strides = array<i32>} : memref<2x3x128xf32, #tpu.memory_space<vmem>>, vector<1x3x128xf32>,
    return
  }
  func.func @transform_0(%arg0: i32) -> (i32, i32) {
    %c0_i32 = arith.constant 0 : i32
    %c0_i32_0 = arith.constant 0 : i32
    %c0_i32_1 = arith.constant 0 : i32
    return %c0_i32, %c0_i32_0 : i32, i32
  }
  func.func @transform_1(%arg0: i32) -> (i32, i32) {
    %c0_i32 = arith.constant 0 : i32
    %c0_i32_0 = arith.constant 0 : i32
    return %c0_i32, %arg0 : i32, i32
  }
  func.func @transform_2(%arg0: i32) -> (i32, i32) {
    %c0_i32 = arith.constant 0 : i32
    %c0_i32_0 = arith.constant 0 : i32
    return %c0_i32, %arg0 : i32, i32
  }
  func.func @transform_3(%arg0: i32) -> (i32, i32) {
    %c0_i32 = arith.constant 0 : i32
    %c0_i32_0 = arith.constant 0 : i32
    %c0_i32_1 = arith.constant 0 : i32
    return %c0_i32, %c0_i32_0 : i32, i32
  }
  func.func @transform_4(%arg0: i32) -> (i32, i32) {
    %c0_i32 = arith.constant 0 : i32
    %c0_i32_0 = arith.constant 0 : i32
    return %c0_i32, %arg0 : i32, i32
  }
  func.func @transform_5(%arg0: i32) -> (i32, i32, i32) {
    %c0_i32 = arith.constant 0 : i32
    %c0_i32_0 = arith.constant 0 : i32
    %c0_i32_1 = arith.constant 0 : i32
    return %c0_i32, %c0_i32_0, %arg0 : i32, i32, i32
  }
}

</mosaic_0001>

<llo_original>
// kernel: smpl_forward.1
$region0: #{smpl_forward.1}
  #allocation0 [shape = 'u32[]', space=smem, size = 0x4, offset = 0x4, fixed_abs, tag = 'smem constant byte address 0x4 - core index']
  #allocation1 [shape = 'u32[144,128]{1,0:T(1,128)}', space=vmem, size = 0x12000, scoped, tag = 'internal scratch']
  %s0 = inlined_call_operand.vmem [shape: bf16[2,256], index: 0, kind: input, shape index: {}]
  %s1 = inlined_call_operand.vmem [shape: bf16[256,1536], index: 1, kind: input, shape index: {}]
  %s2 = inlined_call_operand.vmem [shape: f32[1,1536], index: 2, kind: input, shape index: {}]
  %s3 = inlined_call_operand.vmem [shape: f32[32,32], index: 3, kind: input, shape index: {}]
  %s4 = inlined_call_operand.vmem [shape: bf16[32,512], index: 4, kind: input, shape index: {}]
  %s5 = inlined_call_operand.vmem [shape: f32[2,3,512], index: 5, kind: output, shape index: {}]
  %s6 = sld [smem:[#allocation0]]
  $region157: #{smpl_forward.1} parent=0
    _
  %s8 = ssub.s32 1, %s6
  %s9 = scalar_select 0, %s8, %s6
  $region1: #{smpl_forward.1} parent=0
    #allocation2 [shape = 'u8[393216]{0}', space=vmem, size = 0x60000, scoped, tag = 'input window, operand 1']
    #allocation3 [shape = 'u8[16384]{0}', space=vmem, size = 0x4000, scoped, tag = 'input window, operand 4']
    #allocation4 [shape = 'u8[8192]{0}', space=vmem, size = 0x2000, scoped, tag = 'output window, operand 0']
    loop: start=0, step=1, limit=6
    $region2: #{smpl_forward.1} parent=1 // loop_pre_header
      _
    $region3: #{smpl_forward.1} parent=1 // loop_header
      %s11 = sphi 0, %s15
      %p12 = scmp.ge.s32.totalorder %s11, 6
      %s19 = sphi 0, %s19
      %s21 = sphi 0, %s19
      %s22 = sphi 0, %s21
      %s36 = sphi 0, %s22
      %s42 = sphi 0, %s44
      %s45 = sphi 0, %s42
      %s46 = sphi 0, %s45
      %s62 = sphi 0, %s46
      %s68 = sphi 0, %s70
      %s71 = sphi 0, %s68
      %s72 = sphi 0, %s71
      %s88 = sphi 0, %s72
      %s92 = sphi 0, %s92
      %s94 = sphi 0, %s92
      %s95 = sphi 0, %s94
      %s109 = sphi 0, %s95
      %s115 = sphi 0, %s117
      %s118 = sphi 0, %s115
      %s119 = sphi 0, %s118
      %s135 = sphi 0, %s119
      %s141 = sphi 0, %s143
      %s144 = sphi 0, %s141
      %s145 = sphi 0, %s144
      %s161 = sphi 0, %s145
    $region4: #{smpl_forward.1} parent=1 // loop_header_branch
      %14 = sbr.rel (%p12) target = $region8
    $region5: #{smpl_forward.1} parent=1 // loop_body
      %s16 = ssub.s32 %s11, 1
      %s17 = ssub.s32 %s11, 2
      %s18 = sadd.s32 %s11, 1
      %s20 = sadd.s32 %s19, 1
      %p23 = scmp.eq.s32.totalorder %s11, 3
      %p24 = scmp.ne.s32.totalorder %s19, %s21
      %p25 = scmp.eq.s32.totalorder %s11, 0
      %p26 = por %p24, %p25
      %p27 = scmp.ne.s32.totalorder %s19, %s21
      %p28 = scmp.eq.s32.totalorder %s16, 3
      %p29 = por %p27, %p28
      %p30 = scmp.ne.s32.totalorder %s21, %s22
      %p31 = scmp.eq.s32.totalorder %s16, 0
      %p32 = por %p30, %p31
      %p33 = scmp.ne.s32.totalorder %s21, %s22
      %p34 = scmp.eq.s32.totalorder %s17, 3
      %p35 = por %p33, %p34
      %p37 = scmp.ne.s32.totalorder %s22, %s36
      %p38 = scmp.eq.s32.totalorder %s17, 0
      %p39 = por %p37, %p38
      %s40 = ssub.s32 %s11, %s18
      %p41 = scmp.eq.s32.totalorder %s40, 0
      %s43 = sadd.s32 %s42, 1
      %s44 = scalar_select %p41, %s42, %s43
      %p47 = pneg %p41
      %p48 = scmp.eq.s32.totalorder %s11, 3
      %p49 = por %p47, %p48
      %p50 = scmp.ne.s32.totalorder %s42, %s45
      %p51 = scmp.eq.s32.totalorder %s11, 0
      %p52 = por %p50, %p51
      %p53 = scmp.ne.s32.totalorder %s42, %s45
      %p54 = scmp.eq.s32.totalorder %s16, 3
      %p55 = por %p53, %p54
      %p56 = scmp.ne.s32.totalorder %s45, %s46
      %p57 = scmp.eq.s32.totalorder %s16, 0
      %p58 = por %p56, %p57
      %p59 = scmp.ne.s32.totalorder %s45, %s46
      %p60 = scmp.eq.s32.totalorder %s17, 3
      %p61 = por %p59, %p60
      %p63 = scmp.ne.s32.totalorder %s46, %s62
      %p64 = scmp.eq.s32.totalorder %s17, 0
      %p65 = por %p63, %p64
      %s66 = ssub.s32 %s11, %s18
      %p67 = scmp.eq.s32.totalorder %s66, 0
      %s69 = sadd.s32 %s68, 1
      %s70 = scalar_select %p67, %s68, %s69
      %p73 = pneg %p67
      %p74 = scmp.eq.s32.totalorder %s11, 3
      %p75 = por %p73, %p74
      %p76 = scmp.ne.s32.totalorder %s68, %s71
      %p77 = scmp.eq.s32.totalorder %s11, 0
      %p78 = por %p76, %p77
      %p79 = scmp.ne.s32.totalorder %s68, %s71
      %p80 = scmp.eq.s32.totalorder %s16, 3
      %p81 = por %p79, %p80
      %p82 = scmp.ne.s32.totalorder %s71, %s72
      %p83 = scmp.eq.s32.totalorder %s16, 0
      %p84 = por %p82, %p83
      %p85 = scmp.ne.s32.totalorder %s71, %s72
      %p86 = scmp.eq.s32.totalorder %s17, 3
      %p87 = por %p85, %p86
      %p89 = scmp.ne.s32.totalorder %s72, %s88
      %p90 = scmp.eq.s32.totalorder %s17, 0
      %p91 = por %p89, %p90
      %s93 = sadd.s32 %s92, 1
      %p96 = scmp.eq.s32.totalorder %s11, 3
      %p97 = scmp.ne.s32.totalorder %s92, %s94
      %p98 = scmp.eq.s32.totalorder %s11, 0
      %p99 = por %p97, %p98
      %p100 = scmp.ne.s32.totalorder %s92, %s94
      %p101 = scmp.eq.s32.totalorder %s16, 3
      %p102 = por %p100, %p101
      %p103 = scmp.ne.s32.totalorder %s94, %s95
      %p104 = scmp.eq.s32.totalorder %s16, 0
      %p105 = por %p103, %p104
      %p106 = scmp.ne.s32.totalorder %s94, %s95
      %p107 = scmp.eq.s32.totalorder %s17, 3
      %p108 = por %p106, %p107
      %p110 = scmp.ne.s32.totalorder %s95, %s109
      %p111 = scmp.eq.s32.totalorder %s17, 0
      %p112 = por %p110, %p111
      %s113 = ssub.s32 %s11, %s18
      %p114 = scmp.eq.s32.totalorder %s113, 0
      %s116 = sadd.s32 %s115, 1
      %s117 = scalar_select %p114, %s115, %s116
      %p120 = pneg %p114
      %p121 = scmp.eq.s32.totalorder %s11, 3
      %p122 = por %p120, %p121
      %p123 = scmp.ne.s32.totalorder %s115, %s118
      %p124 = scmp.eq.s32.totalorder %s11, 0
      %p125 = por %p123, %p124
      %p126 = scmp.ne.s32.totalorder %s115, %s118
      %p127 = scmp.eq.s32.totalorder %s16, 3
      %p128 = por %p126, %p127
      %p129 = scmp.ne.s32.totalorder %s118, %s119
      %p130 = scmp.eq.s32.totalorder %s16, 0
      %p131 = por %p129, %p130
      %p132 = scmp.ne.s32.totalorder %s118, %s119
      %p133 = scmp.eq.s32.totalorder %s17, 3
      %p134 = por %p132, %p133
      %p136 = scmp.ne.s32.totalorder %s119, %s135
      %p137 = scmp.eq.s32.totalorder %s17, 0
      %p138 = por %p136, %p137
      %s139 = ssub.s32 %s11, %s18
      %p140 = scmp.eq.s32.totalorder %s139, 0
      %s142 = sadd.s32 %s141, 1
      %s143 = scalar_select %p140, %s141, %s142
      %p146 = pneg %p140
      %p147 = scmp.eq.s32.totalorder %s11, 3
      %p148 = por %p146, %p147
      %p149 = scmp.ne.s32.totalorder %s141, %s144
      %p150 = scmp.eq.s32.totalorder %s11, 0
      %p151 = por %p149, %p150
      %p152 = scmp.ne.s32.totalorder %s141, %s144
      %p153 = scmp.eq.s32.totalorder %s16, 3
      %p154 = por %p152, %p153
      %p155 = scmp.ne.s32.totalorder %s144, %s145
      %p156 = scmp.eq.s32.totalorder %s16, 0
      %p157 = por %p155, %p156
      %p158 = scmp.ne.s32.totalorder %s144, %s145
      %p159 = scmp.eq.s32.totalorder %s17, 3
      %p160 = por %p158, %p159
      %p162 = scmp.ne.s32.totalorder %s145, %s161
      %p163 = scmp.eq.s32.totalorder %s17, 0
      %p164 = por %p162, %p163
      %p165 = scmp.le.s32.totalorder 1, %s11
      %p166 = scmp.lt.s32.totalorder %s11, 5
      %p167 = pnand %p165, %p166
      %p168 = pneg %p167
      // Predicated region
      $region9: #{smpl_forward.1} parent=5 // pred_check
        _
      $region10: #{smpl_forward.1} parent=5 // pred_check_branch
        %170 = sbr.rel (%p167) target = $region12
      $region11: #{smpl_forward.1} parent=5 // pred_region
        %s171 = ssub.s32 %s11, 1
        // Predicated region
        $region13: #{smpl_forward.1} parent=11 // pred_check
          %p172 = pneg %p32
        $region14: #{smpl_forward.1} parent=11 // pred_check_branch
          %174 = sbr.rel (%p172) target = $region16
        $region15: #{smpl_forward.1} parent=11 // pred_region
          _
        $region16: #{smpl_forward.1} parent=11 // pred_fallthru
          _
        // Predicated region
        $region17: #{smpl_forward.1} parent=11 // pred_check
          %p175 = pneg %p105
        $region18: #{smpl_forward.1} parent=11 // pred_check_branch
          %177 = sbr.rel (%p175) target = $region20
        $region19: #{smpl_forward.1} parent=11 // pred_region
          _
        $region20: #{smpl_forward.1} parent=11 // pred_fallthru
          _
      $region12: #{smpl_forward.1} parent=5 // pred_fallthru
        _
      %p178 = scmp.lt.s32.totalorder %s11, 4
      // Predicated region
      $region21: #{smpl_forward.1} parent=5 // pred_check
        %p179 = pneg %p178
      $region22: #{smpl_forward.1} parent=5 // pred_check_branch
        %181 = sbr.rel (%p179) target = $region24
      $region23: #{smpl_forward.1} parent=5 // pred_region
        // Predicated region
        $region25: #{smpl_forward.1} parent=23 // pred_check
          %p182 = pneg %p52
        $region26: #{smpl_forward.1} parent=23 // pred_check_branch
          %184 = sbr.rel (%p182) target = $region28
        $region27: #{smpl_forward.1} parent=23 // pred_region
          %s185 = sand.u32 %s42, 1
          %s186 = sand.u32 %s42, 1
          %s187 = smul.addr %s186, 384
          %s188 = scalar_lea.vmem [#allocation2], %s187
          %s189 = smul.u32 3, %s11
          %s190 = smul.addr %s189, 4
          %s191 = scalar_lea.vmem %s1, %s190
          // Predicated region
          $region29: #{smpl_forward.1} parent=27 // pred_check
            _
          $region30: #{smpl_forward.1} parent=27 // pred_check_branch
            %193 = sbr.rel (0) target = $region32
          $region31: #{smpl_forward.1} parent=27 // pred_region
            // Predicated region
            $region33: #{smpl_forward.1} parent=31 // pred_check
              _
            $region34: #{smpl_forward.1} parent=31 // pred_check_branch
              %195 = sbr.rel (0) target = $region36
            $region35: #{smpl_forward.1} parent=31 // pred_region
              %s196 = scalar_lea.vmem %s191, 8
              %s197 = scalar_lea.vmem %s188, 8 [#allocation2]
              loop: start=0, step=1, limit=1
              $region37: #{smpl_forward.1} parent=35 // loop_pre_header
                _
              $region38: #{smpl_forward.1} parent=35 // loop_header
                %s199 = sphi 0, %s203
                %p200 = scmp.ge.s32.totalorder %s199, 1
                %s204 = sphi %s191, %s191
                %s205 = sphi %s188, %s188
              $region39: #{smpl_forward.1} parent=35 // loop_header_branch
                %202 = sbr.rel (%p200) target = $region43
              $region40: #{smpl_forward.1} parent=35 // loop_body
                %v206 = vld [vmem:[%s204] sm:$0xff]
                %207 = vst [vmem:[%s205] sm:$0xff] %v206
                %v208 = vld [vmem:[%s204 + $0x30] sm:$0xff]
                %209 = vst [vmem:[%s205 + $0xc] sm:$0xff] %v208
                %v210 = vld [vmem:[%s204 + $0x60] sm:$0xff]
                %211 = vst [vmem:[%s205 + $0x18] sm:$0xff] %v210
                %v212 = vld [vmem:[%s204 + $0x90] sm:$0xff]
                %213 = vst [vmem:[%s205 + $0x24] sm:$0xff] %v212
                %v214 = vld [vmem:[%s204 + $0xc0] sm:$0xff]
                %215 = vst [vmem:[%s205 + $0x30] sm:$0xff] %v214
                %v216 = vld [vmem:[%s204 + $0xf0] sm:$0xff]
                %217 = vst [vmem:[%s205 + $0x3c] sm:$0xff] %v216
                %v218 = vld [vmem:[%s204 + $0x120] sm:$0xff]
                %219 = vst [vmem:[%s205 + $0x48] sm:$0xff] %v218
                %v220 = vld [vmem:[%s204 + $0x150] sm:$0xff]
                %221 = vst [vmem:[%s205 + $0x54] sm:$0xff] %v220
                %v222 = vld [vmem:[%s204 + $0x180] sm:$0xff]
                %223 = vst [vmem:[%s205 + $0x60] sm:$0xff] %v222
                %v224 = vld [vmem:[%s204 + $0x1b0] sm:$0xff]
                %225 = vst [vmem:[%s205 + $0x6c] sm:$0xff] %v224
                %v226 = vld [vmem:[%s204 + $0x1e0] sm:$0xff]
                %227 = vst [vmem:[%s205 + $0x78] sm:$0xff] %v226
                %v228 = vld [vmem:[%s204 + $0x210] sm:$0xff]
                %229 = vst [vmem:[%s205 + $0x84] sm:$0xff] %v228
                %v230 = vld [vmem:[%s204 + $0x240] sm:$0xff]
                %231 = vst [vmem:[%s205 + $0x90] sm:$0xff] %v230
                %v232 = vld [vmem:[%s204 + $0x270] sm:$0xff]
                %233 = vst [vmem:[%s205 + $0x9c] sm:$0xff] %v232
                %v234 = vld [vmem:[%s204 + $0x2a0] sm:$0xff]
                %235 = vst [vmem:[%s205 + $0xa8] sm:$0xff] %v234
                %v236 = vld [vmem:[%s204 + $0x2d0] sm:$0xff]
                %237 = vst [vmem:[%s205 + $0xb4] sm:$0xff] %v236
                %v238 = vld [vmem:[%s204 + $0x300] sm:$0xff]
                %239 = vst [vmem:[%s205 + $0xc0] sm:$0xff] %v238
                %v240 = vld [vmem:[%s204 + $0x330] sm:$0xff]
                %241 = vst [vmem:[%s205 + $0xcc] sm:$0xff] %v240
                %v242 = vld [vmem:[%s204 + $0x360] sm:$0xff]
                %243 = vst [vmem:[%s205 + $0xd8] sm:$0xff] %v242
                %v244 = vld [vmem:[%s204 + $0x390] sm:$0xff]
                %245 = vst [vmem:[%s205 + $0xe4] sm:$0xff] %v244
                %v246 = vld [vmem:[%s204 + $0x3c0] sm:$0xff]
                %247 = vst [vmem:[%s205 + $0xf0] sm:$0xff] %v246
                %v248 = vld [vmem:[%s204 + $0x3f0] sm:$0xff]
                %249 = vst [vmem:[%s205 + $0xfc] sm:$0xff] %v248
                %v250 = vld [vmem:[%s204 + $0x420] sm:$0xff]
                %251 = vst [vmem:[%s205 + $0x108] sm:$0xff] %v250
                %v252 = vld [vmem:[%s204 + $0x450] sm:$0xff]
                %253 = vst [vmem:[%s205 + $0x114] sm:$0xff] %v252
                %v254 = vld [vmem:[%s204 + $0x480] sm:$0xff]
                %255 = vst [vmem:[%s205 + $0x120] sm:$0xff] %v254
                %v256 = vld [vmem:[%s204 + $0x4b0] sm:$0xff]
                %257 = vst [vmem:[%s205 + $0x12c] sm:$0xff] %v256
                %v258 = vld [vmem:[%s204 + $0x4e0] sm:$0xff]
                %259 = vst [vmem:[%s205 + $0x138] sm:$0xff] %v258
                %v260 = vld [vmem:[%s204 + $0x510] sm:$0xff]
                %261 = vst [vmem:[%s205 + $0x144] sm:$0xff] %v260
                %v262 = vld [vmem:[%s204 + $0x540] sm:$0xff]
                %263 = vst [vmem:[%s205 + $0x150] sm:$0xff] %v262
                %v264 = vld [vmem:[%s204 + $0x570] sm:$0xff]
                %265 = vst [vmem:[%s205 + $0x15c] sm:$0xff] %v264
                %v266 = vld [vmem:[%s204 + $0x5a0] sm:$0xff]
                %267 = vst [vmem:[%s205 + $0x168] sm:$0xff] %v266
                %v268 = vld [vmem:[%s204 + $0x5d0] sm:$0xff]
                %269 = vst [vmem:[%s205 + $0x174] sm:$0xff] %v268
              $region41: #{smpl_forward.1} parent=35 // loop_footer
                %s203 = sadd.s32 1, %s199
              $region42: #{smpl_forward.1} parent=35 // loop_footer_branch
                %198 = sbr.rel target = $region38
              $region43: #{smpl_forward.1} parent=35 // loop_exit
                _
              loop: start=0, step=1, limit=1
              $region44: #{smpl_forward.1} parent=35 // loop_pre_header
                _
              $region45: #{smpl_forward.1} parent=35 // loop_header
                %s272 = sphi 0, %s276
                %p273 = scmp.ge.s32.totalorder %s272, 1
                %s277 = sphi %s196, %s196
                %s278 = sphi %s197, %s197
              $region46: #{smpl_forward.1} parent=35 // loop_header_branch
                %275 = sbr.rel (%p273) target = $region50
              $region47: #{smpl_forward.1} parent=35 // loop_body
                %v279 = vld [vmem:[%s277] sm:$0xf]
                %280 = vst [vmem:[%s278] sm:$0xf] %v279
                %v281 = vld [vmem:[%s277 + $0x30] sm:$0xf]
                %282 = vst [vmem:[%s278 + $0xc] sm:$0xf] %v281
                %v283 = vld [vmem:[%s277 + $0x60] sm:$0xf]
                %284 = vst [vmem:[%s278 + $0x18] sm:$0xf] %v283
                %v285 = vld [vmem:[%s277 + $0x90] sm:$0xf]
                %286 = vst [vmem:[%s278 + $0x24] sm:$0xf] %v285
                %v287 = vld [vmem:[%s277 + $0xc0] sm:$0xf]
                %288 = vst [vmem:[%s278 + $0x30] sm:$0xf] %v287
                %v289 = vld [vmem:[%s277 + $0xf0] sm:$0xf]
                %290 = vst [vmem:[%s278 + $0x3c] sm:$0xf] %v289
                %v291 = vld [vmem:[%s277 + $0x120] sm:$0xf]
                %292 = vst [vmem:[%s278 + $0x48] sm:$0xf] %v291
                %v293 = vld [vmem:[%s277 + $0x150] sm:$0xf]
                %294 = vst [vmem:[%s278 + $0x54] sm:$0xf] %v293
                %v295 = vld [vmem:[%s277 + $0x180] sm:$0xf]
                %296 = vst [vmem:[%s278 + $0x60] sm:$0xf] %v295
                %v297 = vld [vmem:[%s277 + $0x1b0] sm:$0xf]
                %298 = vst [vmem:[%s278 + $0x6c] sm:$0xf] %v297
                %v299 = vld [vmem:[%s277 + $0x1e0] sm:$0xf]
                %300 = vst [vmem:[%s278 + $0x78] sm:$0xf] %v299
                %v301 = vld [vmem:[%s277 + $0x210] sm:$0xf]
                %302 = vst [vmem:[%s278 + $0x84] sm:$0xf] %v301
                %v303 = vld [vmem:[%s277 + $0x240] sm:$0xf]
                %304 = vst [vmem:[%s278 + $0x90] sm:$0xf] %v303
                %v305 = vld [vmem:[%s277 + $0x270] sm:$0xf]
                %306 = vst [vmem:[%s278 + $0x9c] sm:$0xf] %v305
                %v307 = vld [vmem:[%s277 + $0x2a0] sm:$0xf]
                %308 = vst [vmem:[%s278 + $0xa8] sm:$0xf] %v307
                %v309 = vld [vmem:[%s277 + $0x2d0] sm:$0xf]
                %310 = vst [vmem:[%s278 + $0xb4] sm:$0xf] %v309
                %v311 = vld [vmem:[%s277 + $0x300] sm:$0xf]
                %312 = vst [vmem:[%s278 + $0xc0] sm:$0xf] %v311
                %v313 = vld [vmem:[%s277 + $0x330] sm:$0xf]
                %314 = vst [vmem:[%s278 + $0xcc] sm:$0xf] %v313
                %v315 = vld [vmem:[%s277 + $0x360] sm:$0xf]
                %316 = vst [vmem:[%s278 + $0xd8] sm:$0xf] %v315
                %v317 = vld [vmem:[%s277 + $0x390] sm:$0xf]
                %318 = vst [vmem:[%s278 + $0xe4] sm:$0xf] %v317
                %v319 = vld [vmem:[%s277 + $0x3c0] sm:$0xf]
                %320 = vst [vmem:[%s278 + $0xf0] sm:$0xf] %v319
                %v321 = vld [vmem:[%s277 + $0x3f0] sm:$0xf]
                %322 = vst [vmem:[%s278 + $0xfc] sm:$0xf] %v321
                %v323 = vld [vmem:[%s277 + $0x420] sm:$0xf]
                %324 = vst [vmem:[%s278 + $0x108] sm:$0xf] %v323
                %v325 = vld [vmem:[%s277 + $0x450] sm:$0xf]
                %326 = vst [vmem:[%s278 + $0x114] sm:$0xf] %v325
                %v327 = vld [vmem:[%s277 + $0x480] sm:$0xf]
                %328 = vst [vmem:[%s278 + $0x120] sm:$0xf] %v327
                %v329 = vld [vmem:[%s277 + $0x4b0] sm:$0xf]
                %330 = vst [vmem:[%s278 + $0x12c] sm:$0xf] %v329
                %v331 = vld [vmem:[%s277 + $0x4e0] sm:$0xf]
                %332 = vst [vmem:[%s278 + $0x138] sm:$0xf] %v331
                %v333 = vld [vmem:[%s277 + $0x510] sm:$0xf]
                %334 = vst [vmem:[%s278 + $0x144] sm:$0xf] %v333
                %v335 = vld [vmem:[%s277 + $0x540] sm:$0xf]
                %336 = vst [vmem:[%s278 + $0x150] sm:$0xf] %v335
                %v337 = vld [vmem:[%s277 + $0x570] sm:$0xf]
                %338 = vst [vmem:[%s278 + $0x15c] sm:$0xf] %v337
                %v339 = vld [vmem:[%s277 + $0x5a0] sm:$0xf]
                %340 = vst [vmem:[%s278 + $0x168] sm:$0xf] %v339
                %v341 = vld [vmem:[%s277 + $0x5d0] sm:$0xf]
                %342 = vst [vmem:[%s278 + $0x174] sm:$0xf] %v341
              $region48: #{smpl_forward.1} parent=35 // loop_footer
                %s276 = sadd.s32 1, %s272
              $region49: #{smpl_forward.1} parent=35 // loop_footer_branch
                %271 = sbr.rel target = $region45
              $region50: #{smpl_forward.1} parent=35 // loop_exit
                _
            $region36: #{smpl_forward.1} parent=31 // pred_fallthru
              _
          $region32: #{smpl_forward.1} parent=27 // pred_fallthru
            _
          %343 = vnop
        $region28: #{smpl_forward.1} parent=23 // pred_fallthru
          _
        // Predicated region
        $region51: #{smpl_forward.1} parent=23 // pred_check
          %p344 = pneg %p78
        $region52: #{smpl_forward.1} parent=23 // pred_check_branch
          %346 = sbr.rel (%p344) target = $region54
        $region53: #{smpl_forward.1} parent=23 // pred_region
          %s347 = smul.u32 3, %s11
          %p348 = scmp.lt.s32.totalorder %s347, 11
          %s349 = scalar_select %p348, %s347, 11
          %s350 = scalar_lea.vmem %s2, %s349
          %s351 = smul.u32 3, %s11
        $region54: #{smpl_forward.1} parent=23 // pred_fallthru
          _
        // Predicated region
        $region55: #{smpl_forward.1} parent=23 // pred_check
          %p352 = pneg %p125
        $region56: #{smpl_forward.1} parent=23 // pred_check_branch
          %354 = sbr.rel (%p352) target = $region58
        $region57: #{smpl_forward.1} parent=23 // pred_region
          %s355 = sand.u32 %s115, 1
          %s356 = sand.u32 %s115, 1
          %s357 = smul.addr %s356, 16
          %s358 = scalar_lea.vmem [#allocation3], %s357
          %s359 = smul.addr %s11, 4
          %s360 = scalar_lea.vmem %s4, %s359
          // Predicated region
          $region59: #{smpl_forward.1} parent=57 // pred_check
            _
          $region60: #{smpl_forward.1} parent=57 // pred_check_branch
            %362 = sbr.rel (0) target = $region62
          $region61: #{smpl_forward.1} parent=57 // pred_region
            // Predicated region
            $region63: #{smpl_forward.1} parent=61 // pred_check
              _
            $region64: #{smpl_forward.1} parent=61 // pred_check_branch
              %364 = sbr.rel target = $region66
            $region65: #{smpl_forward.1} parent=61 // pred_region
              // Predicated region
              $region78: #{smpl_forward.1} parent=65 // pred_check
                _
              $region79: #{smpl_forward.1} parent=65 // pred_check_branch
                %385 = sbr.rel (0) target = $region81
              $region80: #{smpl_forward.1} parent=65 // pred_region
                loop: start=0, step=1, limit=1
                $region82: #{smpl_forward.1} parent=80 // loop_pre_header
                  _
                $region83: #{smpl_forward.1} parent=80 // loop_header
                  %s387 = sphi 0, %s391
                  %p388 = scmp.ge.s32.totalorder %s387, 1
                  %s392 = sphi %s360, %s360
                  %s393 = sphi %s358, %s358
                $region84: #{smpl_forward.1} parent=80 // loop_header_branch
                  %390 = sbr.rel (%p388) target = $region88
                $region85: #{smpl_forward.1} parent=80 // loop_body
                  _
                $region86: #{smpl_forward.1} parent=80 // loop_footer
                  %s391 = sadd.s32 1, %s387
                $region87: #{smpl_forward.1} parent=80 // loop_footer_branch
                  %386 = sbr.rel target = $region83
                $region88: #{smpl_forward.1} parent=80 // loop_exit
                  _
                loop: start=0, step=1, limit=1
                $region89: #{smpl_forward.1} parent=80 // loop_pre_header
                  _
                $region90: #{smpl_forward.1} parent=80 // loop_header
                  %s396 = sphi 0, %s400
                  %p397 = scmp.ge.s32.totalorder %s396, 1
                  %s401 = sphi %s360, %s360
                  %s402 = sphi %s358, %s358
                $region91: #{smpl_forward.1} parent=80 // loop_header_branch
                  %399 = sbr.rel (%p397) target = $region95
                $region92: #{smpl_forward.1} parent=80 // loop_body
                  %v403 = vld [vmem:[%s401] sm:$0xf]
                  %404 = vst [vmem:[%s402] sm:$0xf] %v403
                  %v405 = vld [vmem:[%s401 + $0x10] sm:$0xf]
                  %406 = vst [vmem:[%s402 + $0x4] sm:$0xf] %v405
                  %v407 = vld [vmem:[%s401 + $0x20] sm:$0xf]
                  %408 = vst [vmem:[%s402 + $0x8] sm:$0xf] %v407
                  %v409 = vld [vmem:[%s401 + $0x30] sm:$0xf]
                  %410 = vst [vmem:[%s402 + $0xc] sm:$0xf] %v409
                $region93: #{smpl_forward.1} parent=80 // loop_footer
                  %s400 = sadd.s32 1, %s396
                $region94: #{smpl_forward.1} parent=80 // loop_footer_branch
                  %395 = sbr.rel target = $region90
                $region95: #{smpl_forward.1} parent=80 // loop_exit
                  _
              $region81: #{smpl_forward.1} parent=65 // pred_fallthru
                _
            $region66: #{smpl_forward.1} parent=61 // pred_fallthru
              _
            // Predicated region
            $region67: #{smpl_forward.1} parent=61 // pred_check
              _
            $region68: #{smpl_forward.1} parent=61 // pred_check_branch
              %366 = sbr.rel (0) target = $region70
            $region69: #{smpl_forward.1} parent=61 // pred_region
              loop: start=0, step=1, limit=1
              $region71: #{smpl_forward.1} parent=69 // loop_pre_header
                _
              $region72: #{smpl_forward.1} parent=69 // loop_header
                %s369 = sphi 0, %s373
                %p370 = scmp.ge.s32.totalorder %s369, 1
                %s374 = sphi %s360, %s360
                %s375 = sphi %s358, %s358
              $region73: #{smpl_forward.1} parent=69 // loop_header_branch
                %372 = sbr.rel (%p370) target = $region77
              $region74: #{smpl_forward.1} parent=69 // loop_body
                %v376 = vld [vmem:[%s374] sm:$0xf]
                %377 = vst [vmem:[%s375] sm:$0xf] %v376
                %v378 = vld [vmem:[%s374 + $0x10] sm:$0xf]
                %379 = vst [vmem:[%s375 + $0x4] sm:$0xf] %v378
                %v380 = vld [vmem:[%s374 + $0x20] sm:$0xf]
                %381 = vst [vmem:[%s375 + $0x8] sm:$0xf] %v380
                %v382 = vld [vmem:[%s374 + $0x30] sm:$0xf]
                %383 = vst [vmem:[%s375 + $0xc] sm:$0xf] %v382
              $region75: #{smpl_forward.1} parent=69 // loop_footer
                %s373 = sadd.s32 1, %s369
              $region76: #{smpl_forward.1} parent=69 // loop_footer_branch
                %368 = sbr.rel target = $region72
              $region77: #{smpl_forward.1} parent=69 // loop_exit
                _
            $region70: #{smpl_forward.1} parent=61 // pred_fallthru
              _
          $region62: #{smpl_forward.1} parent=57 // pred_fallthru
            _
          %411 = vnop
        $region58: #{smpl_forward.1} parent=23 // pred_fallthru
          _
      $region24: #{smpl_forward.1} parent=5 // pred_fallthru
        _
      %p412 = scmp.le.s32.totalorder 1, %s11
      %p413 = scmp.lt.s32.totalorder %s11, 5
      %p414 = pnand %p412, %p413
      %p415 = pneg %p414
      // Predicated region
      $region96: #{smpl_forward.1} parent=5 // pred_check
        _
      $region97: #{smpl_forward.1} parent=5 // pred_check_branch
        %417 = sbr.rel (%p414) target = $region99
      $region98: #{smpl_forward.1} parent=5 // pred_region
        %s418 = ssub.s32 %s11, 1
        %s419 = sand.u32 %s45, 1
        %s420 = sand.u32 %s45, 1
        %s421 = smul.addr %s420, 384
        %s422 = scalar_lea.vmem [#allocation2], %s421
        // Predicated region
        $region100: #{smpl_forward.1} parent=98 // pred_check
          %p423 = pneg %p58
        $region101: #{smpl_forward.1} parent=98 // pred_check_branch
          %425 = sbr.rel (%p423) target = $region103
        $region102: #{smpl_forward.1} parent=98 // pred_region
          _
        $region103: #{smpl_forward.1} parent=98 // pred_fallthru
          _
        %s426 = sand.u32 %s118, 1
        %s427 = sand.u32 %s118, 1
        %s428 = smul.addr %s427, 16
        %s429 = scalar_lea.vmem [#allocation3], %s428
        // Predicated region
        $region104: #{smpl_forward.1} parent=98 // pred_check
          %p430 = pneg %p131
        $region105: #{smpl_forward.1} parent=98 // pred_check_branch
          %432 = sbr.rel (%p430) target = $region107
        $region106: #{smpl_forward.1} parent=98 // pred_region
          _
        $region107: #{smpl_forward.1} parent=98 // pred_fallthru
          _
        %p433 = pneg %p32
        %p434 = pneg %p29
        %s435 = sand.u32 %s45, 1
        %s436 = sand.u32 %s45, 1
        %s437 = smul.addr %s436, 384
        %s438 = scalar_lea.vmem [#allocation2], %s437
        %p439 = pneg %p58
        %p440 = pneg %p55
        %s441 = smul.u32 3, %s16
        %p442 = scmp.lt.s32.totalorder %s441, 11
        %s443 = scalar_select %p442, %s441, 11
        %s444 = scalar_lea.vmem %s2, %s443
        %p445 = pneg %p84
        %p446 = pneg %p81
        %p447 = pneg %p105
        %p448 = pneg %p102
        %s449 = sand.u32 %s118, 1
        %s450 = sand.u32 %s118, 1
        %s451 = smul.addr %s450, 16
        %s452 = scalar_lea.vmem [#allocation3], %s451
        %p453 = pneg %p131
        %p454 = pneg %p128
        %p455 = pneg %p157
        %p456 = pneg %p154
        %s457 = sand.u32 %s144, 1
        %s458 = sand.u32 %s144, 1
        %s459 = smul.addr %s458, 8
        %s460 = scalar_lea.vmem [#allocation4], %s459
        %s461 = smul.u32 3, %s16
        %s462 = smul.u32 3, %s16
        %p463 = scmp.lt.s32.totalorder %s462, 11
        %s464 = scalar_select %p463, %s462, 11
        %s465 = scalar_lea.vmem %s2, %s464
        %s466 = smul.u32 3, %s16
        %v468 = vld [vmem:[%s465] sm:$0x7]
        %v469 = vld [vmem:[%s0] sm:$0x3]
        %v470 = vld [vmem:[%s422] sm:$0xff]
        %v471 = vld [vmem:[%s422 + $0x8] sm:$0xf]
        %v472 = vld [vmem:[%s422 + $0xc] sm:$0xff]
        %v473 = vld [vmem:[%s422 + $0x14] sm:$0xf]
        %v474 = vld [vmem:[%s422 + $0x18] sm:$0xff]
        %v475 = vld [vmem:[%s422 + $0x20] sm:$0xf]
        %v476 = vld [vmem:[%s422 + $0x24] sm:$0xff]
        %v477 = vld [vmem:[%s422 + $0x2c] sm:$0xf]
        %v478 = vld [vmem:[%s422 + $0x30] sm:$0xff]
        %v479 = vld [vmem:[%s422 + $0x38] sm:$0xf]
        %v480 = vld [vmem:[%s422 + $0x3c] sm:$0xff]
        %v481 = vld [vmem:[%s422 + $0x44] sm:$0xf]
        %v482 = vld [vmem:[%s422 + $0x48] sm:$0xff]
        %v483 = vld [vmem:[%s422 + $0x50] sm:$0xf]
        %v484 = vld [vmem:[%s422 + $0x54] sm:$0xff]
        %v485 = vld [vmem:[%s422 + $0x5c] sm:$0xf]
        %v486 = vld [vmem:[%s422 + $0x60] sm:$0xff]
        %v487 = vld [vmem:[%s422 + $0x68] sm:$0xf]
        %v488 = vld [vmem:[%s422 + $0x6c] sm:$0xff]
        %v489 = vld [vmem:[%s422 + $0x74] sm:$0xf]
        %v490 = vld [vmem:[%s422 + $0x78] sm:$0xff]
        %v491 = vld [vmem:[%s422 + $0x80] sm:$0xf]
        %v492 = vld [vmem:[%s422 + $0x84] sm:$0xff]
        %v493 = vld [vmem:[%s422 + $0x8c] sm:$0xf]
        %v494 = vld [vmem:[%s422 + $0x90] sm:$0xff]
        %v495 = vld [vmem:[%s422 + $0x98] sm:$0xf]
        %v496 = vld [vmem:[%s422 + $0x9c] sm:$0xff]
        %v497 = vld [vmem:[%s422 + $0xa4] sm:$0xf]
        %v498 = vld [vmem:[%s422 + $0xa8] sm:$0xff]
        %v499 = vld [vmem:[%s422 + $0xb0] sm:$0xf]
        %v500 = vld [vmem:[%s422 + $0xb4] sm:$0xff]
        %v501 = vld [vmem:[%s422 + $0xbc] sm:$0xf]
        %v502 = vld [vmem:[%s422 + $0xc0] sm:$0xff]
        %v503 = vld [vmem:[%s422 + $0xc8] sm:$0xf]
        %v504 = vld [vmem:[%s422 + $0xcc] sm:$0xff]
        %v505 = vld [vmem:[%s422 + $0xd4] sm:$0xf]
        %v506 = vld [vmem:[%s422 + $0xd8] sm:$0xff]
        %v507 = vld [vmem:[%s422 + $0xe0] sm:$0xf]
        %v508 = vld [vmem:[%s422 + $0xe4] sm:$0xff]
        %v509 = vld [vmem:[%s422 + $0xec] sm:$0xf]
        %v510 = vld [vmem:[%s422 + $0xf0] sm:$0xff]
        %v511 = vld [vmem:[%s422 + $0xf8] sm:$0xf]
        %v512 = vld [vmem:[%s422 + $0xfc] sm:$0xff]
        %v513 = vld [vmem:[%s422 + $0x104] sm:$0xf]
        %v514 = vld [vmem:[%s422 + $0x108] sm:$0xff]
        %v515 = vld [vmem:[%s422 + $0x110] sm:$0xf]
        %v516 = vld [vmem:[%s422 + $0x114] sm:$0xff]
        %v517 = vld [vmem:[%s422 + $0x11c] sm:$0xf]
        %v518 = vld [vmem:[%s422 + $0x120] sm:$0xff]
        %v519 = vld [vmem:[%s422 + $0x128] sm:$0xf]
        %v520 = vld [vmem:[%s422 + $0x12c] sm:$0xff]
        %v521 = vld [vmem:[%s422 + $0x134] sm:$0xf]
        %v522 = vld [vmem:[%s422 + $0x138] sm:$0xff]
        %v523 = vld [vmem:[%s422 + $0x140] sm:$0xf]
        %v524 = vld [vmem:[%s422 + $0x144] sm:$0xff]
        %v525 = vld [vmem:[%s422 + $0x14c] sm:$0xf]
        %v526 = vld [vmem:[%s422 + $0x150] sm:$0xff]
        %v527 = vld [vmem:[%s422 + $0x158] sm:$0xf]
        %v528 = vld [vmem:[%s422 + $0x15c] sm:$0xff]
        %v529 = vld [vmem:[%s422 + $0x164] sm:$0xf]
        %v530 = vld [vmem:[%s422 + $0x168] sm:$0xff]
        %v531 = vld [vmem:[%s422 + $0x170] sm:$0xf]
        %v532 = vld [vmem:[%s422 + $0x174] sm:$0xff]
        %v533 = vld [vmem:[%s422 + $0x17c] sm:$0xf]
        %v536 = vunpack.c.l.s4 1966171168
        %v537 = vunpack.c.0.s8 %v536
        %v538 = vlaneseq
        %v539 = vshrl.u32 %v538, 7
        %v540 = vsub.s32 %v537, %v539
        %v541 = vrot.slane %v469, %v540
        %v542 = vcombine.high %v541, %v541
        %v544 = vunpack.c.l.s4 1966171168
        %v545 = vunpack.c.0.s8 %v544
        %v546 = vlaneseq
        %v547 = vshrl.u32 %v546, 7
        %v548 = vsub.s32 %v545, %v547
        %v549 = vrot.slane %v541, %v548
        %v551 = vunpack.c.l.s4 1966171168
        %v552 = vunpack.c.0.s8 %v551
        %v553 = vlaneseq
        %v554 = vshrl.u32 %v553, 7
        %v555 = vsub.s32 %v552, %v554
        %v556 = vrot.slane %v542, %v555
        %v623 = vunpack.c.l.b16 %v470
        %v624 = vunpack.c.h.b16 %v470
        %v625 = vunpack.c.l.b16 %v471
        %v626 = vunpack.c.l.b16 %v472
        %v627 = vunpack.c.h.b16 %v472
        %v628 = vunpack.c.l.b16 %v473
        %v629 = vunpack.c.l.b16 %v474
        %v630 = vunpack.c.h.b16 %v474
        %v631 = vunpack.c.l.b16 %v475
        %v632 = vunpack.c.l.b16 %v476
        %v633 = vunpack.c.h.b16 %v476
        %v634 = vunpack.c.l.b16 %v477
        %v635 = vunpack.c.l.b16 %v478
        %v636 = vunpack.c.h.b16 %v478
        %v637 = vunpack.c.l.b16 %v479
        %v638 = vunpack.c.l.b16 %v480
        %v639 = vunpack.c.h.b16 %v480
        %v640 = vunpack.c.l.b16 %v481
        %v641 = vunpack.c.l.b16 %v482
        %v642 = vunpack.c.h.b16 %v482
        %v643 = vunpack.c.l.b16 %v483
        %v644 = vunpack.c.l.b16 %v484
        %v645 = vunpack.c.h.b16 %v484
        %v646 = vunpack.c.l.b16 %v485
        %v647 = vunpack.c.l.b16 %v486
        %v648 = vunpack.c.h.b16 %v486
        %v649 = vunpack.c.l.b16 %v487
        %v650 = vunpack.c.l.b16 %v488
        %v651 = vunpack.c.h.b16 %v488
        %v652 = vunpack.c.l.b16 %v489
        %v653 = vunpack.c.l.b16 %v490
        %v654 = vunpack.c.h.b16 %v490
        %v655 = vunpack.c.l.b16 %v491
        %v656 = vunpack.c.l.b16 %v492
        %v657 = vunpack.c.h.b16 %v492
        %v658 = vunpack.c.l.b16 %v493
        %v659 = vunpack.c.l.b16 %v494
        %v660 = vunpack.c.h.b16 %v494
        %v661 = vunpack.c.l.b16 %v495
        %v662 = vunpack.c.l.b16 %v496
        %v663 = vunpack.c.h.b16 %v496
        %v664 = vunpack.c.l.b16 %v497
        %v665 = vunpack.c.l.b16 %v498
        %v666 = vunpack.c.h.b16 %v498
        %v667 = vunpack.c.l.b16 %v499
        %v668 = vunpack.c.l.b16 %v500
        %v669 = vunpack.c.h.b16 %v500
        %v670 = vunpack.c.l.b16 %v501
        %v671 = vunpack.c.l.b16 %v502
        %v672 = vunpack.c.h.b16 %v502
        %v673 = vunpack.c.l.b16 %v503
        %v674 = vunpack.c.l.b16 %v504
        %v675 = vunpack.c.h.b16 %v504
        %v676 = vunpack.c.l.b16 %v505
        %v677 = vunpack.c.l.b16 %v506
        %v678 = vunpack.c.h.b16 %v506
        %v679 = vunpack.c.l.b16 %v507
        %v680 = vunpack.c.l.b16 %v508
        %v681 = vunpack.c.h.b16 %v508
        %v682 = vunpack.c.l.b16 %v509
        %v683 = vunpack.c.l.b16 %v510
        %v684 = vunpack.c.h.b16 %v510
        %v685 = vunpack.c.l.b16 %v511
        %v686 = vunpack.c.l.b16 %v512
        %v687 = vunpack.c.h.b16 %v512
        %v688 = vunpack.c.l.b16 %v513
        %v689 = vunpack.c.l.b16 %v514
        %v690 = vunpack.c.h.b16 %v514
        %v691 = vunpack.c.l.b16 %v515
        %v692 = vunpack.c.l.b16 %v516
        %v693 = vunpack.c.h.b16 %v516
        %v694 = vunpack.c.l.b16 %v517
        %v695 = vunpack.c.l.b16 %v518
        %v696 = vunpack.c.h.b16 %v518
        %v697 = vunpack.c.l.b16 %v519
        %v698 = vunpack.c.l.b16 %v520
        %v699 = vunpack.c.h.b16 %v520
        %v700 = vunpack.c.l.b16 %v521
        %v701 = vunpack.c.l.b16 %v522
        %v702 = vunpack.c.h.b16 %v522
        %v703 = vunpack.c.l.b16 %v523
        %v704 = vunpack.c.l.b16 %v524
        %v705 = vunpack.c.h.b16 %v524
        %v706 = vunpack.c.l.b16 %v525
        %v707 = vunpack.c.l.b16 %v526
        %v708 = vunpack.c.h.b16 %v526
        %v709 = vunpack.c.l.b16 %v527
        %v710 = vunpack.c.l.b16 %v528
        %v711 = vunpack.c.h.b16 %v528
        %v712 = vunpack.c.l.b16 %v529
        %v713 = vunpack.c.l.b16 %v530
        %v714 = vunpack.c.h.b16 %v530
        %v715 = vunpack.c.l.b16 %v531
        %v716 = vunpack.c.l.b16 %v532
        %v717 = vunpack.c.h.b16 %v532
        %v718 = vunpack.c.l.b16 %v533
        %v719 = vpack.c.b16 %v626, %v623
        %v720 = vpack.c.b16 %v627, %v624
        %v721 = vpack.c.b16 %v628, %v625
        %v722 = vpack.c.b16 %v632, %v629
        %v723 = vpack.c.b16 %v633, %v630
        %v724 = vpack.c.b16 %v634, %v631
        %v725 = vpack.c.b16 %v638, %v635
        %v726 = vpack.c.b16 %v639, %v636
        %v727 = vpack.c.b16 %v640, %v637
        %v728 = vpack.c.b16 %v644, %v641
        %v729 = vpack.c.b16 %v645, %v642
        %v730 = vpack.c.b16 %v646, %v643
        %v731 = vpack.c.b16 %v650, %v647
        %v732 = vpack.c.b16 %v651, %v648
        %v733 = vpack.c.b16 %v652, %v649
        %v734 = vpack.c.b16 %v656, %v653
        %v735 = vpack.c.b16 %v657, %v654
        %v736 = vpack.c.b16 %v658, %v655
        %v737 = vpack.c.b16 %v662, %v659
        %v738 = vpack.c.b16 %v663, %v660
        %v739 = vpack.c.b16 %v664, %v661
        %v740 = vpack.c.b16 %v668, %v665
        %v741 = vpack.c.b16 %v669, %v666
        %v742 = vpack.c.b16 %v670, %v667
        %v743 = vpack.c.b16 %v674, %v671
        %v744 = vpack.c.b16 %v675, %v672
        %v745 = vpack.c.b16 %v676, %v673
        %v746 = vpack.c.b16 %v680, %v677
        %v747 = vpack.c.b16 %v681, %v678
        %v748 = vpack.c.b16 %v682, %v679
        %v749 = vpack.c.b16 %v686, %v683
        %v750 = vpack.c.b16 %v687, %v684
        %v751 = vpack.c.b16 %v688, %v685
        %v752 = vpack.c.b16 %v692, %v689
        %v753 = vpack.c.b16 %v693, %v690
        %v754 = vpack.c.b16 %v694, %v691
        %v755 = vpack.c.b16 %v698, %v695
        %v756 = vpack.c.b16 %v699, %v696
        %v757 = vpack.c.b16 %v700, %v697
        %v758 = vpack.c.b16 %v704, %v701
        %v759 = vpack.c.b16 %v705, %v702
        %v760 = vpack.c.b16 %v706, %v703
        %v761 = vpack.c.b16 %v710, %v707
        %v762 = vpack.c.b16 %v711, %v708
        %v763 = vpack.c.b16 %v712, %v709
        %v764 = vpack.c.b16 %v716, %v713
        %v765 = vpack.c.b16 %v717, %v714
        %v766 = vpack.c.b16 %v718, %v715
        %815 = vmatprep.subr.bf16.mxu0 %v720
        %816 = vmatpush1.bf16.msra.mxu0 %v719
        %817 = vmatprep.subr.bf16.mxu0 %v723
        %818 = vmatpush1.bf16.msra.mxu0 %v722
        %819 = vmatprep.subr.bf16.mxu0 %v726
        %820 = vmatpush1.bf16.msra.mxu0 %v725
        %821 = vmatprep.subr.bf16.mxu0 %v729
        %822 = vmatpush1.bf16.msra.mxu0 %v728
        %823 = vmatprep.subr.bf16.mxu0 %v732
        %824 = vmatpush1.bf16.msra.mxu0 %v731
        %825 = vmatprep.subr.bf16.mxu0 %v735
        %826 = vmatpush1.bf16.msra.mxu0 %v734
        %827 = vmatprep.subr.bf16.mxu0 %v738
        %828 = vmatpush1.bf16.msra.mxu0 %v737
        %829 = vmatprep.subr.bf16.mxu0 %v741
        %830 = vmatpush1.bf16.msra.mxu0 %v740
        %831 = vmatprep.subr.bf16.mxu0 %v744
        %832 = vmatpush1.bf16.msra.mxu0 %v743
        %833 = vmatprep.subr.bf16.mxu0 %v747
        %834 = vmatpush1.bf16.msra.mxu0 %v746
        %835 = vmatprep.subr.bf16.mxu0 %v750
        %836 = vmatpush1.bf16.msra.mxu0 %v749
        %837 = vmatprep.subr.bf16.mxu0 %v753
        %838 = vmatpush1.bf16.msra.mxu0 %v752
        %839 = vmatprep.subr.bf16.mxu0 %v756
        %840 = vmatpush1.bf16.msra.mxu0 %v755
        %841 = vmatprep.subr.bf16.mxu0 %v759
        %842 = vmatpush1.bf16.msra.mxu0 %v758
        %843 = vmatprep.subr.bf16.mxu0 %v762
        %844 = vmatpush1.bf16.msra.mxu0 %v761
        %845 = vmatprep.subr.bf16.mxu0 %v765
        %846 = vmatpush1.bf16.msra.mxu0 %v764
        %847 = vmatprep.mubr.bf16.mxu0 %v556
        %848 = vmatmul.mubr.bf16.gmra.mrb[0].mxu0 %v549
        %v849 = vpop.f32.mrb[0].mxu0
        %v850 = vadd.f32 0.0, %v849
        %v851 = vpop.f32.mrb[0].mxu0
        %v852 = vadd.f32 0.0, %v851
        %v853 = vpop.f32.mrb[0].mxu0
        %v854 = vpop.f32.mrb[0].mxu0
        %855 = vdwg.mxu0
        %856 = vmatprep.subr.bf16.mxu0 0
        %857 = vmatpush1.bf16.msra.mxu0 %v721
        %858 = vmatprep.subr.bf16.mxu0 0
        %859 = vmatpush1.bf16.msra.mxu0 %v724
        %860 = vmatprep.subr.bf16.mxu0 0
        %861 = vmatpush1.bf16.msra.mxu0 %v727
        %862 = vmatprep.subr.bf16.mxu0 0
        %863 = vmatpush1.bf16.msra.mxu0 %v730
        %864 = vmatprep.subr.bf16.mxu0 0
        %865 = vmatpush1.bf16.msra.mxu0 %v733
        %866 = vmatprep.subr.bf16.mxu0 0
        %867 = vmatpush1.bf16.msra.mxu0 %v736
        %868 = vmatprep.subr.bf16.mxu0 0
        %869 = vmatpush1.bf16.msra.mxu0 %v739
        %870 = vmatprep.subr.bf16.mxu0 0
        %871 = vmatpush1.bf16.msra.mxu0 %v742
        %872 = vmatprep.subr.bf16.mxu0 0
        %873 = vmatpush1.bf16.msra.mxu0 %v745
        %874 = vmatprep.subr.bf16.mxu0 0
        %875 = vmatpush1.bf16.msra.mxu0 %v748
        %876 = vmatprep.subr.bf16.mxu0 0
        %877 = vmatpush1.bf16.msra.mxu0 %v751
        %878 = vmatprep.subr.bf16.mxu0 0
        %879 = vmatpush1.bf16.msra.mxu0 %v754
        %880 = vmatprep.subr.bf16.mxu0 0
        %881 = vmatpush1.bf16.msra.mxu0 %v757
        %882 = vmatprep.subr.bf16.mxu0 0
        %883 = vmatpush1.bf16.msra.mxu0 %v760
        %884 = vmatprep.subr.bf16.mxu0 0
        %885 = vmatpush1.bf16.msra.mxu0 %v763
        %886 = vmatprep.subr.bf16.mxu0 0
        %887 = vmatpush1.bf16.msra.mxu0 %v766
        %888 = vmatprep.mubr.bf16.mxu0 %v556
        %889 = vmatmul.mubr.bf16.gmra.mrb[0].mxu0 %v549
        %v890 = vpop.f32.mrb[0].mxu0
        %v891 = vadd.f32 0.0, %v890
        %v892 = vpop.f32.mrb[0].mxu0
        %v893 = vpop.f32.mrb[0].mxu0
        %v894 = vpop.f32.mrb[0].mxu0
        %895 = vdwg.mxu0
        %v897 = vlaneseq
        %v898 = vshrl.u32 %v897, 7
        %v899 = vsub.s32 0, %v898
        %v900 = vrot.slane %v468, %v899
        %v901 = vlaneseq
        %v902 = vshrl.u32 %v901, 7
        %v903 = vsub.s32 1, %v902
        %v904 = vrot.slane %v468, %v903
        %v905 = vlaneseq
        %v906 = vshrl.u32 %v905, 7
        %v907 = vsub.s32 2, %v906
        %v908 = vrot.slane %v468, %v907
        %v912 = vadd.f32 %v900, %v850
        %v913 = vadd.f32 %v904, %v852
        %v914 = vadd.f32 %v908, %v891
        %v915 = vld [vmem:[%s3] sm:$0xff]
        %v916 = vld [vmem:[%s3 + $0x8] sm:$0xff]
        %v917 = vld [vmem:[%s3 + $0x10] sm:$0xff]
        %v918 = vld [vmem:[%s3 + $0x18] sm:$0xff]
        %v919 = vld [vmem:[%s429] sm:$0xf]
        %v920 = vld [vmem:[%s429 + $0x4] sm:$0xf]
        %v921 = vld [vmem:[%s429 + $0x8] sm:$0xf]
        %v922 = vld [vmem:[%s429 + $0xc] sm:$0xf]
        %v923 = vunpack.c.l.bf16 %v919
        %v924 = vunpack.c.l.bf16 %v920
        %v925 = vunpack.c.l.bf16 %v921
        %v926 = vunpack.c.l.bf16 %v922
        %vm927 = vcmask 261120
        %v929 = vsel %vm927, %v915, 0
        %v932 = vsel %vm927, %v916, 0
        %v935 = vsel %vm927, %v917, 0
        %v938 = vsel %vm927, %v918, 0
        %940 = vmatprep.subr.mxu0 0.0
        %941 = vmatpush1.msra.mxu0 %v923
        %942 = vmatprep.subr.mxu0 0.0
        %943 = vmatpush1.msra.mxu0 %v924
        %944 = vmatprep.subr.mxu0 0.0
        %945 = vmatpush1.msra.mxu0 %v925
        %946 = vmatprep.subr.mxu0 0.0
        %947 = vmatpush1.msra.mxu0 %v926
        %948 = vmatprep.subr.mxu0 0.0
        %949 = vmatpush1.msra.mxu0 0.0
        %950 = vmatprep.subr.mxu0 0.0
        %951 = vmatpush1.msra.mxu0 0.0
        %952 = vmatprep.subr.mxu0 0.0
        %953 = vmatpush1.msra.mxu0 0.0
        %954 = vmatprep.subr.mxu0 0.0
        %955 = vmatpush1.msra.mxu0 0.0
        %956 = vmatprep.subr.mxu0 0.0
        %957 = vmatpush1.msra.mxu0 0.0
        %958 = vmatprep.subr.mxu0 0.0
        %959 = vmatpush1.msra.mxu0 0.0
        %960 = vmatprep.subr.mxu0 0.0
        %961 = vmatpush1.msra.mxu0 0.0
        %962 = vmatprep.subr.mxu0 0.0
        %963 = vmatpush1.msra.mxu0 0.0
        %964 = vmatprep.subr.mxu0 0.0
        %965 = vmatpush1.msra.mxu0 0.0
        %966 = vmatprep.subr.mxu0 0.0
        %967 = vmatpush1.msra.mxu0 0.0
        %968 = vmatprep.subr.mxu0 0.0
        %969 = vmatpush1.msra.mxu0 0.0
        %970 = vmatprep.subr.mxu0 0.0
        %971 = vmatpush1.msra.mxu0 0.0
        %972 = vmatprep.subr.mxu0 0.0
        %973 = vmatpush1.msra.mxu0 0.0
        %974 = vmatprep.subr.mxu0 0.0
        %975 = vmatpush1.msra.mxu0 0.0
        %976 = vmatprep.subr.mxu0 0.0
        %977 = vmatpush1.msra.mxu0 0.0
        %978 = vmatprep.subr.mxu0 0.0
        %979 = vmatpush1.msra.mxu0 0.0
        %980 = vmatprep.subr.mxu0 0.0
        %981 = vmatpush1.msra.mxu0 0.0
        %982 = vmatprep.subr.mxu0 0.0
        %983 = vmatpush1.msra.mxu0 0.0
        %984 = vmatprep.subr.mxu0 0.0
        %985 = vmatpush1.msra.mxu0 0.0
        %986 = vmatprep.subr.mxu0 0.0
        %987 = vmatpush1.msra.mxu0 0.0
        %988 = vmatprep.subr.mxu0 0.0
        %989 = vmatpush1.msra.mxu0 0.0
        %990 = vmatprep.subr.mxu0 0.0
        %991 = vmatpush1.msra.mxu0 0.0
        %992 = vmatprep.subr.mxu0 0.0
        %993 = vmatpush1.msra.mxu0 0.0
        %994 = vmatprep.subr.mxu0 0.0
        %995 = vmatpush1.msra.mxu0 0.0
        %996 = vmatprep.subr.mxu0 0.0
        %997 = vmatpush1.msra.mxu0 0.0
        %998 = vmatprep.subr.mxu0 0.0
        %999 = vmatpush1.msra.mxu0 0.0
        %1000 = vmatprep.subr.mxu0 0.0
        %1001 = vmatpush1.msra.mxu0 0.0
        %1002 = vmatprep.subr.mxu0 0.0
        %1003 = vmatpush1.msra.mxu0 0.0
        %1004 = vmatprep.mubr.f32.mxu0 0.0
        %1005 = vmatmul.mubr.f32.gmra.mrb[0].mxu0 %v929
        %v1006 = vpop.f32.mrb[0].mxu0
        %v1007 = vadd.f32 0.0, %v1006
        %v1008 = vpop.f32.mrb[0].mxu0
        %1009 = vmatprep.mubr.f32.mxu0 0.0
        %1010 = vmatmul.mubr.f32.gmra.mrb[0].mxu0 %v932
        %v1011 = vpop.f32.mrb[0].mxu0
        %v1012 = vadd.f32 0.0, %v1011
        %v1013 = vpop.f32.mrb[0].mxu0
        %1014 = vmatprep.mubr.f32.mxu0 0.0
        %1015 = vmatmul.mubr.f32.gmra.mrb[0].mxu0 %v935
        %v1016 = vpop.f32.mrb[0].mxu0
        %v1017 = vadd.f32 0.0, %v1016
        %v1018 = vpop.f32.mrb[0].mxu0
        %1019 = vmatprep.mubr.f32.mxu0 0.0
        %1020 = vmatmul.mubr.f32.gmra.mrb[0].mxu0 %v938
        %v1021 = vpop.f32.mrb[0].mxu0
        %v1022 = vadd.f32 0.0, %v1021
        %v1023 = vpop.f32.mrb[0].mxu0
        %1024 = vdwg.mxu0
        %v1025 = vlaneseq
        %v1026 = vshrl.u32 %v1025, 7
        %v1027 = vsub.s32 0, %v1026
        %v1028 = vrot.slane %v912, %v1027
        %v1029 = vmul.f32 %v1007, %v1028
        %v1031 = vrot.slane %v1029, 4
        %v1033 = vadd.f32 %v1012, %v1031
        %v1034 = vlaneseq
        %v1035 = vshrl.u32 %v1034, 7
        %v1036 = vsub.s32 0, %v1035
        %v1037 = vrot.slane %v913, %v1036
        %v1038 = vmul.f32 %v1007, %v1037
        %v1039 = vadd.f32 %v1033, %v1038
        %v1040 = vlaneseq
        %v1041 = vshrl.u32 %v1040, 7
        %v1042 = vsub.s32 0, %v1041
        %v1043 = vrot.slane %v914, %v1042
        %v1044 = vmul.f32 %v1012, %v1043
        %v1046 = vrot.slane %v1044, 4
        %v1048 = vadd.f32 %v1039, %v1046
        %1049 = vst [vmem:[%s460 - $0x4] sm:$0x70] %v1048
        %v1050 = vlaneseq
        %v1051 = vshrl.u32 %v1050, 7
        %v1052 = vsub.s32 1, %v1051
        %v1053 = vrot.slane %v912, %v1052
        %v1054 = vmul.f32 %v1017, %v1053
        %v1056 = vrot.slane %v1054, 4
        %v1058 = vadd.f32 %v1022, %v1056
        %v1059 = vlaneseq
        %v1060 = vshrl.u32 %v1059, 7
        %v1061 = vsub.s32 1, %v1060
        %v1062 = vrot.slane %v913, %v1061
        %v1063 = vmul.f32 %v1017, %v1062
        %v1064 = vadd.f32 %v1058, %v1063
        %v1065 = vlaneseq
        %v1066 = vshrl.u32 %v1065, 7
        %v1067 = vsub.s32 1, %v1066
        %v1068 = vrot.slane %v914, %v1067
        %v1069 = vmul.f32 %v1022, %v1068
        %v1071 = vrot.slane %v1069, 4
        %v1073 = vadd.f32 %v1064, %v1071
        %s1074 = scalar_lea.vmem %s460, 4 [#allocation4]
        %1075 = vst [vmem:[%s1074 - $0x4] sm:$0x70] %v1073
        %s1076 = sand.u32 %s144, 1
        %s1077 = sand.u32 %s144, 1
        %s1078 = smul.addr %s1077, 8
        %s1079 = scalar_lea.vmem [#allocation4], %s1078
        // Predicated region
        $region108: #{smpl_forward.1} parent=98 // pred_check
          %p1080 = pneg %p154
        $region109: #{smpl_forward.1} parent=98 // pred_check_branch
          %1082 = sbr.rel (%p1080) target = $region111
        $region110: #{smpl_forward.1} parent=98 // pred_region
          %s1083 = smul.addr %s16, 4
          %s1084 = scalar_lea.vmem %s5, %s1083
          // Predicated region
          $region112: #{smpl_forward.1} parent=110 // pred_check
            _
          $region113: #{smpl_forward.1} parent=110 // pred_check_branch
            %1086 = sbr.rel (0) target = $region115
          $region114: #{smpl_forward.1} parent=110 // pred_region
            // Predicated region
            $region116: #{smpl_forward.1} parent=114 // pred_check
              _
            $region117: #{smpl_forward.1} parent=114 // pred_check_branch
              %1088 = sbr.rel target = $region119
            $region118: #{smpl_forward.1} parent=114 // pred_region
              // Predicated region
              $region131: #{smpl_forward.1} parent=118 // pred_check
                _
              $region132: #{smpl_forward.1} parent=118 // pred_check_branch
                %1105 = sbr.rel (0) target = $region134
              $region133: #{smpl_forward.1} parent=118 // pred_region
                loop: start=0, step=1, limit=1
                $region135: #{smpl_forward.1} parent=133 // loop_pre_header
                  _
                $region136: #{smpl_forward.1} parent=133 // loop_header
                  %s1107 = sphi 0, %s1111
                  %p1108 = scmp.ge.s32.totalorder %s1107, 1
                  %s1112 = sphi %s1079, %s1079
                  %s1113 = sphi %s1084, %s1084
                $region137: #{smpl_forward.1} parent=133 // loop_header_branch
                  %1110 = sbr.rel (%p1108) target = $region141
                $region138: #{smpl_forward.1} parent=133 // loop_body
                  _
                $region139: #{smpl_forward.1} parent=133 // loop_footer
                  %s1111 = sadd.s32 1, %s1107
                $region140: #{smpl_forward.1} parent=133 // loop_footer_branch
                  %1106 = sbr.rel target = $region136
                $region141: #{smpl_forward.1} parent=133 // loop_exit
                  _
                loop: start=0, step=1, limit=1
                $region142: #{smpl_forward.1} parent=133 // loop_pre_header
                  _
                $region143: #{smpl_forward.1} parent=133 // loop_header
                  %s1116 = sphi 0, %s1120
                  %p1117 = scmp.ge.s32.totalorder %s1116, 1
                  %s1121 = sphi %s1079, %s1079
                  %s1122 = sphi %s1084, %s1084
                $region144: #{smpl_forward.1} parent=133 // loop_header_branch
                  %1119 = sbr.rel (%p1117) target = $region148
                $region145: #{smpl_forward.1} parent=133 // loop_body
                  %v1123 = vld [vmem:[%s1121] sm:$0xf]
                  %1124 = vst [vmem:[%s1122] sm:$0xf] %v1123
                  %v1125 = vld [vmem:[%s1121 + $0x4] sm:$0xf]
                  %1126 = vst [vmem:[%s1122 + $0x10] sm:$0xf] %v1125
                $region146: #{smpl_forward.1} parent=133 // loop_footer
                  %s1120 = sadd.s32 1, %s1116
                $region147: #{smpl_forward.1} parent=133 // loop_footer_branch
                  %1115 = sbr.rel target = $region143
                $region148: #{smpl_forward.1} parent=133 // loop_exit
                  _
              $region134: #{smpl_forward.1} parent=118 // pred_fallthru
                _
            $region119: #{smpl_forward.1} parent=114 // pred_fallthru
              _
            // Predicated region
            $region120: #{smpl_forward.1} parent=114 // pred_check
              _
            $region121: #{smpl_forward.1} parent=114 // pred_check_branch
              %1090 = sbr.rel (0) target = $region123
            $region122: #{smpl_forward.1} parent=114 // pred_region
              loop: start=0, step=1, limit=1
              $region124: #{smpl_forward.1} parent=122 // loop_pre_header
                _
              $region125: #{smpl_forward.1} parent=122 // loop_header
                %s1093 = sphi 0, %s1097
                %p1094 = scmp.ge.s32.totalorder %s1093, 1
                %s1098 = sphi %s1079, %s1079
                %s1099 = sphi %s1084, %s1084
              $region126: #{smpl_forward.1} parent=122 // loop_header_branch
                %1096 = sbr.rel (%p1094) target = $region130
              $region127: #{smpl_forward.1} parent=122 // loop_body
                %v1100 = vld [vmem:[%s1098] sm:$0xf]
                %1101 = vst [vmem:[%s1099] sm:$0xf] %v1100
                %v1102 = vld [vmem:[%s1098 + $0x4] sm:$0xf]
                %1103 = vst [vmem:[%s1099 + $0x10] sm:$0xf] %v1102
              $region128: #{smpl_forward.1} parent=122 // loop_footer
                %s1097 = sadd.s32 1, %s1093
              $region129: #{smpl_forward.1} parent=122 // loop_footer_branch
                %1092 = sbr.rel target = $region125
              $region130: #{smpl_forward.1} parent=122 // loop_exit
                _
            $region123: #{smpl_forward.1} parent=114 // pred_fallthru
              _
          $region115: #{smpl_forward.1} parent=110 // pred_fallthru
            _
          %1127 = vnop
        $region111: #{smpl_forward.1} parent=98 // pred_fallthru
          _
      $region99: #{smpl_forward.1} parent=5 // pred_fallthru
        _
      %p1128 = scmp.le.s32.totalorder 2, %s11
      // Predicated region
      $region149: #{smpl_forward.1} parent=5 // pred_check
        %p1129 = pneg %p1128
      $region150: #{smpl_forward.1} parent=5 // pred_check_branch
        %1131 = sbr.rel (%p1129) target = $region152
      $region151: #{smpl_forward.1} parent=5 // pred_region
        %s1132 = ssub.s32 %s11, 2
        // Predicated region
        $region153: #{smpl_forward.1} parent=151 // pred_check
          %p1133 = pneg %p160
        $region154: #{smpl_forward.1} parent=151 // pred_check_branch
          %1135 = sbr.rel (%p1133) target = $region156
        $region155: #{smpl_forward.1} parent=151 // pred_region
          %s1136 = sand.u32 %s145, 1
          %s1137 = sand.u32 %s145, 1
          %s1138 = smul.addr %s1137, 8
          %s1139 = scalar_lea.vmem [#allocation4], %s1138
        $region156: #{smpl_forward.1} parent=151 // pred_fallthru
          _
      $region152: #{smpl_forward.1} parent=5 // pred_fallthru
        _
    $region6: #{smpl_forward.1} parent=1 // loop_footer
      %s15 = sadd.s32 1, %s11
    $region7: #{smpl_forward.1} parent=1 // loop_footer_branch
      %10 = sbr.rel target = $region3
    $region8: #{smpl_forward.1} parent=1 // loop_exit
      _

</llo_original>
